<compile_context>
chip_gen: v7x
topology: tpu7x:2x2x1
jax: 0.10.0
libtpu: 0.0.40
codegen_flags: <defaults>
</compile_context>

<pallas_src>
import functools

import jax
import jax.numpy as jnp
from jax import lax
from jax.experimental import pallas as pl
from jax.experimental.pallas import tpu as pltpu


# Headroom under v7x's 64 MiB per-TensorCore physical VMEM (v5e/v6e: 128 MiB).
# Tables whose resident footprint exceeds this take the DMA row-gather path.
_VMEM_BUDGET_BYTES = 48 << 20
# Vocab-contraction chunk in the one-hot kernel (caps live one-hot at TN x 512,
# keeps K a multiple of 256 per MXU pass on v6e/v7x).
_K_CHUNK = 512
# In-flight row DMAs in the gather path.
_DMA_NBUF = 8


def _pick_tn(n_tokens, tn_max):
    """Token tile: big enough that the output-write DMA dominates the ~0.35us
    per-grid-step pipeline overhead, but capped so the grid keeps >= 2 steps
    (v7x megacore shards a 'parallel' axis across its 2 TensorCores)."""
    tn = tn_max
    while tn > 8 and (n_tokens + tn - 1) // tn < 2:
        tn //= 2
    return max(tn, 8)


def _onehot_gather_kernel(rows_ref, table_ref, out_ref, *acc, k_chunk):
    # rows_ref : (1, 1, TN) int32 - lane-dense flat row indices for this tile
    # table_ref: (Vp, D)          - VMEM-resident table (blocks + padding row)
    # out_ref  : (TN, D)
    # acc      : optional (TN, D) f32 VMEM accumulator (only when Vp > k_chunk)
    tn, _ = out_ref.shape
    vp = table_ref.shape[0]
    # Lane-major -> sublane-major relayout of the row ids (tiny: TN/128 vregs).
    rows_col = jnp.transpose(rows_ref[0])                 # (TN, 1) int32
    n_chunks = (vp + k_chunk - 1) // k_chunk

    def chunk_dot(start, size):
        col = lax.broadcasted_iota(jnp.int32, (tn, size), 1) + start
        onehot = (col == rows_col).astype(table_ref.dtype)    # exact {0, 1}
        return jnp.dot(onehot, table_ref[start:start + size, :],
                       preferred_element_type=jnp.float32)

    if n_chunks == 1:
        out_ref[...] = chunk_dot(0, vp).astype(out_ref.dtype)
    else:
        acc_ref = acc[0]
        acc_ref[...] = jnp.zeros_like(acc_ref)
        for c in range(n_chunks):                          # static, unrolled
            start = c * k_chunk
            acc_ref[...] += chunk_dot(start, min(k_chunk, vp - start))
        out_ref[...] = acc_ref[...].astype(out_ref.dtype)


def _dma_gather_kernel(rows_smem, table_hbm, out_ref, buf, sem, *, nbuf):
    # rows_smem: (Npad,) int32 in SMEM (scalar-prefetched) - flat row indices
    # table_hbm: (Vp, D) left in HBM (memory_space=pl.ANY)
    # out_ref  : (TN, D) VMEM output block
    # buf      : (nbuf, D) VMEM landing rows; sem: (nbuf,) DMA semaphores
    tn = out_ref.shape[0]
    base = pl.program_id(0) * tn

    def start(t):
        slot = t % nbuf
        pltpu.make_async_copy(table_hbm.at[rows_smem[base + t]],
                              buf.at[slot], sem.at[slot]).start()

    def wait_and_store(t):
        slot = t % nbuf
        # All row copies have identical shape; src row 0 only sizes the wait.
        pltpu.make_async_copy(table_hbm.at[0], buf.at[slot], sem.at[slot]).wait()
        out_ref[pl.ds(t, 1), :] = buf[pl.ds(slot, 1), :]

    for t in range(nbuf):          # prime nbuf in-flight row fetches (nbuf <= TN)
        start(t)

    if tn > nbuf:
        @pl.loop(0, tn - nbuf)
        def _(t):
            wait_and_store(t)
            start(t + nbuf)

    @pl.loop(tn - nbuf, tn)
    def _(t):
        wait_and_store(t)


def blockwise_embedding_gather(rows_flat, table, *, tn_max=1024, force_path=None):
    """out[i, :] = table[rows_flat[i], :].  rows_flat: (N,) int32, table: (V, D).

    force_path: None (auto VMEM-budget selection), "onehot", or "dma".
    """
    n = int(rows_flat.shape[0])
    vp0, d = table.shape
    # Pad the table row count to a sublane multiple; padded rows are never hit.
    vp = ((vp0 + 7) // 8) * 8
    if vp != vp0:
        table = jnp.pad(table, ((0, vp - vp0), (0, 0)))

    out_dtype = table.dtype
    itemsize = jnp.dtype(out_dtype).itemsize

    tn = _pick_tn(n, tn_max)
    n_pad = ((n + tn - 1) // tn) * tn
    rows_flat = jnp.pad(rows_flat.astype(jnp.int32), (0, n_pad - n))
    grid = (n_pad // tn,)

    # Honest VMEM accounting for the resident one-hot path.
    k_eff = min(vp, _K_CHUNK)
    n_chunks = (vp + _K_CHUNK - 1) // _K_CHUNK
    resident_bytes = (
        2 * vp * d * itemsize            # table block (double-buffered alloc; the
                                         # constant index_map copies it only once)
        + 2 * 8 * tn * 4                 # rows blocks: (1,1,TN) pads to 8 sublanes
        + 2 * tn * d * itemsize          # output blocks
        + tn * k_eff * 4                 # live one-hot chunk
        + (tn * d * 4 if n_chunks > 1 else 0)   # f32 accumulator scratch
    )
    if force_path is None:
        use_dma = resident_bytes > _VMEM_BUDGET_BYTES
    else:
        use_dma = force_path == "dma"

    if not use_dma:
        # Resident-table one-hot MXU gather (small / mid vocab).
        rows3 = rows_flat.reshape(grid[0], 1, tn)            # lane-dense rows
        vmem_limit = int(min(max(resident_bytes + (2 << 20), 16 << 20), 60 << 20))
        scratch = [pltpu.VMEM((tn, d), jnp.float32)] if n_chunks > 1 else []
        out = pl.pallas_call(
            functools.partial(_onehot_gather_kernel, k_chunk=_K_CHUNK),
            out_shape=jax.ShapeDtypeStruct((n_pad, d), out_dtype),
            grid_spec=pltpu.PrefetchScalarGridSpec(
                num_scalar_prefetch=0,
                grid=grid,
                in_specs=[
                    pl.BlockSpec((1, 1, tn), lambda i: (i, 0, 0)),   # rows tile
                    pl.BlockSpec((vp, d), lambda i: (0, 0)),         # resident table
                ],
                out_specs=pl.BlockSpec((tn, d), lambda i: (i, 0)),
                scratch_shapes=scratch),
            compiler_params=pltpu.CompilerParams(
                dimension_semantics=("parallel",),
                vmem_limit_bytes=vmem_limit),
        )(rows3, table)
    else:
        # Large-vocab path: rows via scalar prefetch (SMEM), table stays in HBM,
        # per-row DMA gather directly onto the HBM roofline (bit-exact copies).
        nbuf = min(_DMA_NBUF, tn)
        vmem_limit = int(max(2 * tn * d * itemsize + (4 << 20), 16 << 20))
        out = pl.pallas_call(
            functools.partial(_dma_gather_kernel, nbuf=nbuf),
            out_shape=jax.ShapeDtypeStruct((n_pad, d), out_dtype),
            grid_spec=pltpu.PrefetchScalarGridSpec(
                num_scalar_prefetch=1,                       # rows -> SMEM
                grid=grid,
                in_specs=[pl.BlockSpec(memory_space=pl.ANY)],    # table in HBM
                out_specs=pl.BlockSpec((tn, d), lambda i, rows: (i, 0)),
                scratch_shapes=[pltpu.VMEM((nbuf, d), out_dtype),
                                pltpu.SemaphoreType.DMA((nbuf,))]),
            compiler_params=pltpu.CompilerParams(
                dimension_semantics=("parallel",),
                vmem_limit_bytes=vmem_limit),
        )(rows_flat, table)
    return out[:n]


def blockwise_embedding_forward(src, block_assignment, local_assignment,
                                block_weights, padding_vec, padding_idx,
                                *, tn_max=1024, force_path=None):
    """Plain-JAX glue (token id -> flat table row) around the Pallas gather."""
    nobatch = src.ndim == 1
    if nobatch:
        src = src[None, :]
    b, s = src.shape
    d = block_weights[0].shape[1]

    # Row offset of each block inside the concatenated table.
    offs = [0]
    for w in block_weights[:-1]:
        offs.append(offs[-1] + int(w.shape[0]))
    block_offsets = jnp.array(offs, dtype=jnp.int32)
    block_assignment = block_assignment.astype(jnp.int32)
    local_assignment = local_assignment.astype(jnp.int32)

    has_pad = (padding_vec is not None) and (padding_idx != -1)
    if has_pad:
        # padding_vec folded in as one extra table row so the kernel is a pure gather.
        table = jnp.concatenate(list(block_weights) + [padding_vec.reshape(1, d)],
                                axis=0)
        pad_row = table.shape[0] - 1
        is_pad = src == padding_idx
        idx_adj = jnp.where(src > padding_idx, src - 1, src)
        idx_safe = jnp.where(is_pad, 0, idx_adj)
        # NOTE: out-of-range token ids are clamped by JAX's gather; PyTorch raises.
        rows = block_offsets[block_assignment[idx_safe]] + local_assignment[idx_safe]
        rows = jnp.where(is_pad, pad_row, rows)
    else:
        table = jnp.concatenate(list(block_weights), axis=0)
        rows = block_offsets[block_assignment[src]] + local_assignment[src]

    # TODO(synk): the `temp_embedding` / `needs_restoration` caching branch of the
    # PyTorch forward is host-side Python state (restore()/clear()), not a compute
    # path; it is not translated.
    out_flat = blockwise_embedding_gather(rows.reshape(b * s), table,
                                          tn_max=tn_max, force_path=force_path)
    out = out_flat.reshape(b, s, d)
    return out[0] if nobatch else out


if __name__ == "__main__":
    # Module configuration (deterministic, synthetic, small).
    D = 128                                  # output_dim
    padding_idx = 3
    block_rows = [4, 8]                      # block_sizes = [(4, _), (8, _)]
    vocab_no_pad = sum(block_rows)           # 12 entries in `assignment`
    # assignment: idx 0..3 -> block 0 local 0..3 ; idx 4..11 -> block 1 local 0..7
    block_assignment = jnp.array([0] * 4 + [1] * 8, dtype=jnp.int32)
    local_assignment = jnp.array(list(range(4)) + list(range(8)), dtype=jnp.int32)

    key = jax.random.PRNGKey(0)
    k0, k1, k2, k3 = jax.random.split(key, 4)
    w0 = jax.random.normal(k0, (block_rows[0], D), dtype=jnp.float32)
    w1 = jax.random.normal(k1, (block_rows[1], D), dtype=jnp.float32)
    padding_vec = jax.random.normal(k2, (D,), dtype=jnp.float32)

    # Input tokens: (B=2, S=8), values in [0, 12], where 3 is the padding token.
    B, S = 2, 8
    src = jax.random.randint(k3, (B, S), 0, vocab_no_pad + 1, dtype=jnp.int32)
    src = src.at[0, 1].set(padding_idx)      # make sure the padding path runs

    # Pure-JAX reference.
    table_ref = jnp.concatenate([w0, w1], axis=0)
    block_offsets = jnp.array([0, block_rows[0]], dtype=jnp.int32)
    is_pad = src == padding_idx
    idx_adj = jnp.where(src > padding_idx, src - 1, src)
    idx_safe = jnp.where(is_pad, 0, idx_adj)
    rows_ref = block_offsets[block_assignment[idx_safe]] + local_assignment[idx_safe]
    ref = jnp.where(is_pad[..., None], padding_vec[None, None, :], table_ref[rows_ref])

    # Path 1: auto selection (tiny table -> VMEM-resident one-hot MXU gather).
    out = blockwise_embedding_forward(src, block_assignment, local_assignment,
                                      [w0, w1], padding_vec, padding_idx)
    out = jax.block_until_ready(out)
    assert out.shape == (B, S, D)
    assert jnp.allclose(out, ref, atol=1e-5, rtol=1e-5)

    # Path 2: force the large-vocab DMA row-gather path (bit-exact row copies).
    out_dma = blockwise_embedding_forward(src, block_assignment, local_assignment,
                                          [w0, w1], padding_vec, padding_idx,
                                          force_path="dma")
    out_dma = jax.block_until_ready(out_dma)
    assert out_dma.shape == (B, S, D)
    assert jnp.allclose(out_dma, ref, atol=1e-5, rtol=1e-5)

    print("KERNEL_OK")
</pallas_src>

<mosaic_0001>
module attributes {stable_mosaic.version = 11 : i64} {
  func.func @_onehot_gather_kernel(%arg0: i32, %arg1: memref<1x1x8xi32, #tpu.memory_space<vmem>>, %arg2: memref<16x128xf32, #tpu.memory_space<vmem>>, %arg3: memref<8x128xf32, #tpu.memory_space<vmem>>) attributes {dimension_semantics = [#tpu.dimension_semantics<parallel>], iteration_bounds = array<i64: 2>, scalar_prefetch = 0 : i64, scratch_operands = 0 : i64, tpu.core_type = #tpu.core_type<tc>, window_params = [{transform_indices = @transform_0, window_bounds = array<i64: 1, 1, 8>}, {pipeline_mode = #tpu.pipeline_mode<synchronous>, transform_indices = @transform_1, window_bounds = array<i64: 16, 128>}, {transform_indices = @transform_2, window_bounds = array<i64: 8, 128>}]} {
    %c0 = arith.constant 0 : index
    %c0_0 = arith.constant 0 : index
    %c0_1 = arith.constant 0 : index
    %0 = vector.load %arg1[%c0, %c0_0, %c0_1] : memref<1x1x8xi32, #tpu.memory_space<vmem>>, vector<1x1x8xi32>
    %1 = vector.shape_cast %0 : vector<1x1x8xi32> to vector<1x8xi32>
    %2 = tpu.transpose %1, [1, 0] : vector<1x8xi32> -> vector<8x1xi32>
    %3 = tpu.iota {dimensions = array<i32: 1>} : vector<8x16xi32>
    %c0_i32 = arith.constant 0 : i32
    %4 = vector.broadcast %c0_i32 : i32 to vector<8x16xi32>
    %5 = arith.addi %3, %4 : vector<8x16xi32>
    %6 = vector.broadcast %2 : vector<8x1xi32> to vector<8x16xi32>
    %7 = arith.cmpi eq, %5, %6 : vector<8x16xi32>
    %8 = arith.extui %7 : vector<8x16xi1> to vector<8x16xi32>
    %9 = arith.sitofp %8 : vector<8x16xi32> to vector<8x16xf32>
    %c0_2 = arith.constant 0 : index
    %c0_3 = arith.constant 0 : index
    %10 = vector.load %arg2[%c0_2, %c0_3] : memref<16x128xf32, #tpu.memory_space<vmem>>, vector<16x128xf32>
    %cst = arith.constant dense<0.000000e+00> : vector<8x128xf32>
    %11 = tpu.matmul %9, %10, %cst {dimension_numbers = #tpu.dot_dimension_numbers<[1], [0], [0], [1], [0, 0, 1, 1], [], []>} : vector<8x16xf32>, vector<16x128xf32>, vector<8x128xf32> -> vector<8x128xf32>
    %c0_4 = arith.constant 0 : index
    %c0_5 = arith.constant 0 : index
    %12 = vector.load %arg3[%c0_4, %c0_5] : memref<8x128xf32, #tpu.memory_space<vmem>>, vector<8x128xf32>
    tpu.vector_store %arg3[%c0_4, %c0_5], %11 {strides = array<i32>} : memref<8x128xf32, #tpu.memory_space<vmem>>, vector<8x128xf32>,
    return
  }
  func.func @transform_0(%arg0: i32) -> (i32, i32, i32) {
    %c0_i32 = arith.constant 0 : i32
    %c0_i32_0 = arith.constant 0 : i32
    %c0_i32_1 = arith.constant 0 : i32
    return %arg0, %c0_i32, %c0_i32_0 : i32, i32, i32
  }
  func.func @transform_1(%arg0: i32) -> (i32, i32) {
    %c0_i32 = arith.constant 0 : i32
    %c0_i32_0 = arith.constant 0 : i32
    %c0_i32_1 = arith.constant 0 : i32
    return %c0_i32, %c0_i32_0 : i32, i32
  }
  func.func @transform_2(%arg0: i32) -> (i32, i32) {
    %c0_i32 = arith.constant 0 : i32
    %c0_i32_0 = arith.constant 0 : i32
    return %arg0, %c0_i32 : i32, i32
  }
}

</mosaic_0001>

<llo_original>
// kernel: tpu_custom_call.1
$region0: #{tpu_custom_call.1}
  #allocation0 [shape = 'u32[]', space=smem, size = 0x4, offset = 0x4, fixed_abs, tag = 'smem constant byte address 0x4 - core index']
  #allocation1 [shape = 'u32[144,128]{1,0:T(1,128)}', space=vmem, size = 0x12000, scoped, tag = 'internal scratch']
  %s0 = inlined_call_operand.hbm [shape: s32[2,1,8], index: 0, kind: input, shape index: {}]
  %s1 = inlined_call_operand.hbm [shape: f32[16,128], index: 1, kind: input, shape index: {}]
  %s2 = inlined_call_operand.hbm [shape: f32[16,128], index: 2, kind: output, shape index: {}]
  %s3 = sld [smem:[#allocation0]]
  $region49: #{tpu_custom_call.1} parent=0
    _
  %s5 = ssub.s32 1, %s3
  %s6 = scalar_select 0, %s5, %s3
  $region1: #{tpu_custom_call.1} parent=0
    #allocation2 [shape = 'u8[1024]{0}', space=vmem, size = 0x400, scoped, tag = 'input window, operand 0']
    #allocation3 [shape = 's32[2]{0}', space=sflag, size = 0x8, scoped, tag = 'scoped memory for tpu_custom_call.1']
    #allocation4 [shape = 's32[2]{0}', space=sflag, size = 0x8, scoped, tag = 'scoped memory for tpu_custom_call.1']
    #allocation5 [shape = 'u8[8192]{0}', space=vmem, size = 0x2000, scoped, tag = 'input window, operand 1, single buffered']
    #allocation6 [shape = 's32[1]{0}', space=sflag, size = 0x4, scoped, tag = 'scoped memory for tpu_custom_call.1']
    #allocation7 [shape = 'u8[8192]{0}', space=vmem, size = 0x2000, scoped, tag = 'output window, operand 0']
    %7 = vsyncpa [#allocation3], 0
    %s8 = scalar_lea.sflag [#allocation3], 1
    %9 = vsyncpa %s8, 0
    %10 = vsyncpa [#allocation6], 0
    %11 = vsyncpa [#allocation4], 0
    %s12 = scalar_lea.sflag [#allocation4], 1
    %13 = vsyncpa %s12, 0
    loop: start=0, step=1, limit=4
    $region2: #{tpu_custom_call.1} parent=1 // loop_pre_header
      _
    $region3: #{tpu_custom_call.1} parent=1 // loop_header
      %s15 = sphi 0, %s19
      %p16 = scmp.ge.s32.totalorder %s15, 4
      %s25 = sphi 0, %s27
      %s28 = sphi 0, %s25
      %s29 = sphi 0, %s28
      %s45 = sphi 0, %s29
      %s49 = sphi 0, %s49
      %s51 = sphi 0, %s49
      %s52 = sphi 0, %s51
      %s66 = sphi 0, %s52
      %s72 = sphi 0, %s74
      %s75 = sphi 0, %s72
      %s76 = sphi 0, %s75
      %s92 = sphi 0, %s76
    $region4: #{tpu_custom_call.1} parent=1 // loop_header_branch
      %18 = sbr.rel (%p16) target = $region8
    $region5: #{tpu_custom_call.1} parent=1 // loop_body
      %s20 = ssub.s32 %s15, 1
      %s21 = ssub.s32 %s15, 2
      %s22 = sadd.s32 %s15, 1
      %s23 = ssub.s32 %s15, %s22
      %p24 = scmp.eq.s32.totalorder %s23, 0
      %s26 = sadd.s32 %s25, 1
      %s27 = scalar_select %p24, %s25, %s26
      %p30 = pneg %p24
      %p31 = scmp.eq.s32.totalorder %s15, 1
      %p32 = por %p30, %p31
      %p33 = scmp.ne.s32.totalorder %s25, %s28
      %p34 = scmp.eq.s32.totalorder %s15, 0
      %p35 = por %p33, %p34
      %p36 = scmp.ne.s32.totalorder %s25, %s28
      %p37 = scmp.eq.s32.totalorder %s20, 1
      %p38 = por %p36, %p37
      %p39 = scmp.ne.s32.totalorder %s28, %s29
      %p40 = scmp.eq.s32.totalorder %s20, 0
      %p41 = por %p39, %p40
      %p42 = scmp.ne.s32.totalorder %s28, %s29
      %p43 = scmp.eq.s32.totalorder %s21, 1
      %p44 = por %p42, %p43
      %p46 = scmp.ne.s32.totalorder %s29, %s45
      %p47 = scmp.eq.s32.totalorder %s21, 0
      %p48 = por %p46, %p47
      %s50 = sadd.s32 %s49, 1
      %p53 = scmp.eq.s32.totalorder %s15, 1
      %p54 = scmp.ne.s32.totalorder %s49, %s51
      %p55 = scmp.eq.s32.totalorder %s15, 0
      %p56 = por %p54, %p55
      %p57 = scmp.ne.s32.totalorder %s49, %s51
      %p58 = scmp.eq.s32.totalorder %s20, 1
      %p59 = por %p57, %p58
      %p60 = scmp.ne.s32.totalorder %s51, %s52
      %p61 = scmp.eq.s32.totalorder %s20, 0
      %p62 = por %p60, %p61
      %p63 = scmp.ne.s32.totalorder %s51, %s52
      %p64 = scmp.eq.s32.totalorder %s21, 1
      %p65 = por %p63, %p64
      %p67 = scmp.ne.s32.totalorder %s52, %s66
      %p68 = scmp.eq.s32.totalorder %s21, 0
      %p69 = por %p67, %p68
      %s70 = ssub.s32 %s15, %s22
      %p71 = scmp.eq.s32.totalorder %s70, 0
      %s73 = sadd.s32 %s72, 1
      %s74 = scalar_select %p71, %s72, %s73
      %p77 = pneg %p71
      %p78 = scmp.eq.s32.totalorder %s15, 1
      %p79 = por %p77, %p78
      %p80 = scmp.ne.s32.totalorder %s72, %s75
      %p81 = scmp.eq.s32.totalorder %s15, 0
      %p82 = por %p80, %p81
      %p83 = scmp.ne.s32.totalorder %s72, %s75
      %p84 = scmp.eq.s32.totalorder %s20, 1
      %p85 = por %p83, %p84
      %p86 = scmp.ne.s32.totalorder %s75, %s76
      %p87 = scmp.eq.s32.totalorder %s20, 0
      %p88 = por %p86, %p87
      %p89 = scmp.ne.s32.totalorder %s75, %s76
      %p90 = scmp.eq.s32.totalorder %s21, 1
      %p91 = por %p89, %p90
      %p93 = scmp.ne.s32.totalorder %s76, %s92
      %p94 = scmp.eq.s32.totalorder %s21, 0
      %p95 = por %p93, %p94
      %p96 = scmp.le.s32.totalorder 1, %s15
      %p97 = scmp.lt.s32.totalorder %s15, 3
      %p98 = pnand %p96, %p97
      %p99 = pneg %p98
      // Predicated region
      $region9: #{tpu_custom_call.1} parent=5 // pred_check
        _
      $region10: #{tpu_custom_call.1} parent=5 // pred_check_branch
        %101 = sbr.rel (%p98) target = $region12
      $region11: #{tpu_custom_call.1} parent=5 // pred_region
        %s102 = ssub.s32 %s15, 1
        // Predicated region
        $region13: #{tpu_custom_call.1} parent=11 // pred_check
          %p103 = pneg %p62
        $region14: #{tpu_custom_call.1} parent=11 // pred_check_branch
          %105 = sbr.rel (%p103) target = $region16
        $region15: #{tpu_custom_call.1} parent=11 // pred_region
          %s107 = ssub.s32 256, 256
          %108 = vsyncadd [#allocation6], %s107
          %s109 = sshll.u32 [#allocation5], 4
          %s110 = int_to_ptr.vmem [resolvable:$true] %s109
          %115 = dma.hbm_to_vmem [thread:$0]  %s1, 256, %s110, [#allocation6], 128, 128, 8
        $region16: #{tpu_custom_call.1} parent=11 // pred_fallthru
          _
      $region12: #{tpu_custom_call.1} parent=5 // pred_fallthru
        _
      %p116 = scmp.lt.s32.totalorder %s15, 2
      // Predicated region
      $region17: #{tpu_custom_call.1} parent=5 // pred_check
        %p117 = pneg %p116
      $region18: #{tpu_custom_call.1} parent=5 // pred_check_branch
        %119 = sbr.rel (%p117) target = $region20
      $region19: #{tpu_custom_call.1} parent=5 // pred_region
        // Predicated region
        $region21: #{tpu_custom_call.1} parent=19 // pred_check
          %p120 = pneg %p35
        $region22: #{tpu_custom_call.1} parent=19 // pred_check_branch
          %122 = sbr.rel (%p120) target = $region24
        $region23: #{tpu_custom_call.1} parent=19 // pred_region
          %s123 = sand.u32 %s25, 1
          %s124 = scalar_lea.sflag [#allocation3], %s123
          %s125 = sand.u32 %s25, 1
          %s126 = scalar_lea.vmem [#allocation2], %s125
          %s128 = ssub.s32 16, 16
          %129 = vsyncadd %s124, %s128
          %s130 = smul.addr %s15, 16
          %s131 = scalar_lea.hbm %s0, %s130
          %s133 = sshll.u32 %s126, 4
          %s134 = int_to_ptr.vmem [resolvable:$true] %s133
          %136 = dma.hbm_to_vmem [thread:$0]  %s131, 16, %s134, %s124
        $region24: #{tpu_custom_call.1} parent=19 // pred_fallthru
          _
      $region20: #{tpu_custom_call.1} parent=5 // pred_fallthru
        _
      %p137 = scmp.le.s32.totalorder 1, %s15
      %p138 = scmp.lt.s32.totalorder %s15, 3
      %p139 = pnand %p137, %p138
      %p140 = pneg %p139
      // Predicated region
      $region25: #{tpu_custom_call.1} parent=5 // pred_check
        _
      $region26: #{tpu_custom_call.1} parent=5 // pred_check_branch
        %142 = sbr.rel (%p139) target = $region28
      $region27: #{tpu_custom_call.1} parent=5 // pred_region
        %s143 = ssub.s32 %s15, 1
        %s144 = sand.u32 %s28, 1
        %s145 = scalar_lea.sflag [#allocation3], %s144
        %s146 = sand.u32 %s28, 1
        %s147 = scalar_lea.vmem [#allocation2], %s146
        // Predicated region
        $region29: #{tpu_custom_call.1} parent=27 // pred_check
          %p148 = pneg %p41
        $region30: #{tpu_custom_call.1} parent=27 // pred_check_branch
          %150 = sbr.rel (%p148) target = $region32
        $region31: #{tpu_custom_call.1} parent=27 // pred_region
          %151 = dma.done %s145, 16
        $region32: #{tpu_custom_call.1} parent=27 // pred_fallthru
          _
        // Predicated region
        $region33: #{tpu_custom_call.1} parent=27 // pred_check
          %p152 = pneg %p62
        $region34: #{tpu_custom_call.1} parent=27 // pred_check_branch
          %154 = sbr.rel (%p152) target = $region36
        $region35: #{tpu_custom_call.1} parent=27 // pred_region
          %155 = dma.done [#allocation6], 256
        $region36: #{tpu_custom_call.1} parent=27 // pred_fallthru
          _
        %s156 = sand.u32 %s28, 1
        %s157 = scalar_lea.sflag [#allocation3], %s156
        %s158 = sand.u32 %s28, 1
        %s159 = scalar_lea.vmem [#allocation2], %s158
        %p160 = pneg %p41
        %p161 = pneg %p38
        %p162 = pneg %p62
        %p163 = pneg %p59
        %p164 = pneg %p88
        %p165 = pneg %p85
        %s166 = sand.u32 %s75, 1
        %s167 = scalar_lea.sflag [#allocation4], %s166
        %s168 = sand.u32 %s75, 1
        %s169 = smul.addr %s168, 8
        %s170 = scalar_lea.vmem [#allocation7], %s169
        %v171 = vld [vmem:[%s147] sm:$0x1]
        %172 = vxpose.xlu0.b32.start [1/16] %v171, 128
        %173 = vxpose.xlu0.b32.cont [2/16] 0, 128
        %174 = vxpose.xlu0.b32.cont [3/16] 0, 128
        %175 = vxpose.xlu0.b32.cont [4/16] 0, 128
        %176 = vxpose.xlu0.b32.cont [5/16] 0, 128
        %177 = vxpose.xlu0.b32.cont [6/16] 0, 128
        %178 = vxpose.xlu0.b32.cont [7/16] 0, 128
        %179 = vxpose.xlu0.b32.cont [8/16] 0, 128
        %180 = vxpose.xlu0.b32.cont [9/16] 0, 128
        %181 = vxpose.xlu0.b32.cont [10/16] 0, 128
        %182 = vxpose.xlu0.b32.cont [11/16] 0, 128
        %183 = vxpose.xlu0.b32.cont [12/16] 0, 128
        %184 = vxpose.xlu0.b32.cont [13/16] 0, 128
        %185 = vxpose.xlu0.b32.cont [14/16] 0, 128
        %186 = vxpose.xlu0.b32.cont [15/16] 0, 128
        %187 = vxpose.xlu0.b32.end [16/16] 0, 128
        %v188 = vpop.trf.xlu0
        %v189 = vpop.trf.xlu0
        %v190 = vpop.trf.xlu0
        %v191 = vpop.trf.xlu0
        %v192 = vpop.trf.xlu0
        %v193 = vpop.trf.xlu0
        %v194 = vpop.trf.xlu0
        %v195 = vpop.trf.xlu0
        %v196 = vpop.trf.xlu0
        %v197 = vpop.trf.xlu0
        %v198 = vpop.trf.xlu0
        %v199 = vpop.trf.xlu0
        %v200 = vpop.trf.xlu0
        %v201 = vpop.trf.xlu0
        %v202 = vpop.trf.xlu0
        %v203 = vpop.trf.xlu0
        %v204 = vlaneseq
        %v205 = vand.u32 %v204, 127
        %206 = vset.pattern.permute.xlu0 0
        %207 = vperm.xlu0 %206, %v188
        %v208 = vpop.permute.xlu0 %207
        %vm209 = vcmp.eq.s32.totalorder %v205, %v208
        %v210 = vsel %vm209, 1, 0
        %v211 = vcvt.s32.f32 %v210
        %v212 = vld [vmem:[#allocation5] sm:$0xff]
        %v213 = vld [vmem:[#allocation5 + $0x8] sm:$0xff]
        %vm214 = vcmask 130048
        %v216 = vsel %vm214, %v211, 0
        %218 = vmatprep.subr.mxu0 0.0
        %219 = vmatpush1.msra.mxu0 %v212
        %220 = vmatprep.subr.mxu0 0.0
        %221 = vmatpush1.msra.mxu0 %v213
        %222 = vmatprep.subr.mxu0 0.0
        %223 = vmatpush1.msra.mxu0 0.0
        %224 = vmatprep.subr.mxu0 0.0
        %225 = vmatpush1.msra.mxu0 0.0
        %226 = vmatprep.subr.mxu0 0.0
        %227 = vmatpush1.msra.mxu0 0.0
        %228 = vmatprep.subr.mxu0 0.0
        %229 = vmatpush1.msra.mxu0 0.0
        %230 = vmatprep.subr.mxu0 0.0
        %231 = vmatpush1.msra.mxu0 0.0
        %232 = vmatprep.subr.mxu0 0.0
        %233 = vmatpush1.msra.mxu0 0.0
        %234 = vmatprep.subr.mxu0 0.0
        %235 = vmatpush1.msra.mxu0 0.0
        %236 = vmatprep.subr.mxu0 0.0
        %237 = vmatpush1.msra.mxu0 0.0
        %238 = vmatprep.subr.mxu0 0.0
        %239 = vmatpush1.msra.mxu0 0.0
        %240 = vmatprep.subr.mxu0 0.0
        %241 = vmatpush1.msra.mxu0 0.0
        %242 = vmatprep.subr.mxu0 0.0
        %243 = vmatpush1.msra.mxu0 0.0
        %244 = vmatprep.subr.mxu0 0.0
        %245 = vmatpush1.msra.mxu0 0.0
        %246 = vmatprep.subr.mxu0 0.0
        %247 = vmatpush1.msra.mxu0 0.0
        %248 = vmatprep.subr.mxu0 0.0
        %249 = vmatpush1.msra.mxu0 0.0
        %250 = vmatprep.subr.mxu0 0.0
        %251 = vmatpush1.msra.mxu0 0.0
        %252 = vmatprep.subr.mxu0 0.0
        %253 = vmatpush1.msra.mxu0 0.0
        %254 = vmatprep.subr.mxu0 0.0
        %255 = vmatpush1.msra.mxu0 0.0
        %256 = vmatprep.subr.mxu0 0.0
        %257 = vmatpush1.msra.mxu0 0.0
        %258 = vmatprep.subr.mxu0 0.0
        %259 = vmatpush1.msra.mxu0 0.0
        %260 = vmatprep.subr.mxu0 0.0
        %261 = vmatpush1.msra.mxu0 0.0
        %262 = vmatprep.subr.mxu0 0.0
        %263 = vmatpush1.msra.mxu0 0.0
        %264 = vmatprep.subr.mxu0 0.0
        %265 = vmatpush1.msra.mxu0 0.0
        %266 = vmatprep.subr.mxu0 0.0
        %267 = vmatpush1.msra.mxu0 0.0
        %268 = vmatprep.subr.mxu0 0.0
        %269 = vmatpush1.msra.mxu0 0.0
        %270 = vmatprep.subr.mxu0 0.0
        %271 = vmatpush1.msra.mxu0 0.0
        %272 = vmatprep.subr.mxu0 0.0
        %273 = vmatpush1.msra.mxu0 0.0
        %274 = vmatprep.subr.mxu0 0.0
        %275 = vmatpush1.msra.mxu0 0.0
        %276 = vmatprep.subr.mxu0 0.0
        %277 = vmatpush1.msra.mxu0 0.0
        %278 = vmatprep.subr.mxu0 0.0
        %279 = vmatpush1.msra.mxu0 0.0
        %280 = vmatprep.subr.mxu0 0.0
        %281 = vmatpush1.msra.mxu0 0.0
        %282 = vmatprep.mubr.f32.mxu0 0.0
        %283 = vmatmul.mubr.f32.gmra.mrb[0].mxu0 %v216
        %v284 = vpop.f32.mrb[0].mxu0
        %v285 = vadd.f32 0.0, %v284
        %v286 = vpop.f32.mrb[0].mxu0
        %287 = vdwg.mxu0
        %288 = vst [vmem:[%s170] sm:$0xff] %v285
        %s289 = sand.u32 %s75, 1
        %s290 = scalar_lea.sflag [#allocation4], %s289
        %s291 = sand.u32 %s75, 1
        %s292 = smul.addr %s291, 8
        %s293 = scalar_lea.vmem [#allocation7], %s292
        // Predicated region
        $region37: #{tpu_custom_call.1} parent=27 // pred_check
          %p294 = pneg %p85
        $region38: #{tpu_custom_call.1} parent=27 // pred_check_branch
          %296 = sbr.rel (%p294) target = $region40
        $region39: #{tpu_custom_call.1} parent=27 // pred_region
          %s298 = ssub.s32 128, 128
          %299 = vsyncadd %s290, %s298
          %s300 = smul.addr %s20, 128
          %s301 = scalar_lea.hbm %s2, %s300
          %s303 = sshll.u32 %s293, 4
          %s304 = int_to_ptr.vmem [resolvable:$true] %s303
          %306 = dma.vmem_to_hbm [thread:$0]  %s304, 128, %s301, %s290
        $region40: #{tpu_custom_call.1} parent=27 // pred_fallthru
          _
      $region28: #{tpu_custom_call.1} parent=5 // pred_fallthru
        _
      %p307 = scmp.le.s32.totalorder 2, %s15
      // Predicated region
      $region41: #{tpu_custom_call.1} parent=5 // pred_check
        %p308 = pneg %p307
      $region42: #{tpu_custom_call.1} parent=5 // pred_check_branch
        %310 = sbr.rel (%p308) target = $region44
      $region43: #{tpu_custom_call.1} parent=5 // pred_region
        %s311 = ssub.s32 %s15, 2
        // Predicated region
        $region45: #{tpu_custom_call.1} parent=43 // pred_check
          %p312 = pneg %p91
        $region46: #{tpu_custom_call.1} parent=43 // pred_check_branch
          %314 = sbr.rel (%p312) target = $region48
        $region47: #{tpu_custom_call.1} parent=43 // pred_region
          %s315 = sand.u32 %s76, 1
          %s316 = scalar_lea.sflag [#allocation4], %s315
          %s317 = sand.u32 %s76, 1
          %s318 = smul.addr %s317, 8
          %s319 = scalar_lea.vmem [#allocation7], %s318
          %320 = dma.done %s316, 128
        $region48: #{tpu_custom_call.1} parent=43 // pred_fallthru
          _
      $region44: #{tpu_custom_call.1} parent=5 // pred_fallthru
        _
    $region6: #{tpu_custom_call.1} parent=1 // loop_footer
      %s19 = sadd.s32 1, %s15
    $region7: #{tpu_custom_call.1} parent=1 // loop_footer_branch
      %14 = sbr.rel target = $region3
    $region8: #{tpu_custom_call.1} parent=1 // loop_exit
      _
    %321 = vsyncpa [#allocation3], 1
    %s322 = scalar_lea.sflag [#allocation3], 1
    %323 = vsyncpa %s322, 1
    %324 = vsyncpa [#allocation6], 1
    %325 = vsyncpa [#allocation4], 1
    %s326 = scalar_lea.sflag [#allocation4], 1
    %327 = vsyncpa %s326, 1

</llo_original>
